<compile_context>
chip_gen: v7x
topology: tpu7x:2x2x1
jax: 0.10.0
libtpu: 0.0.40
codegen_flags: <defaults>
</compile_context>

<pallas_src>
import functools

import jax
import jax.numpy as jnp
from jax import lax
from jax.experimental import pallas as pl
from jax.experimental.pallas import tpu as pltpu


def _round_up(x, m):
    return (x + m - 1) // m * m


def _contrastive_kernel(x_ref, ycol_ref, yrow_ref, out_ref, gram_ref, *,
                        margin, n, n_pad):
    """One D-tile of the streaming Gram accumulation + loss epilogue.

    x_ref:    (n_pad, TK)  features slab for this grid step (native dtype)
    ycol_ref: (n_pad, 1)   labels as column (i32)
    yrow_ref: (1, n_pad)   labels as row (i32)
    out_ref:  (1, 1)       scalar loss (SMEM)
    gram_ref: (n_pad, n_pad) f32 VMEM accumulator, resident across the grid
    """
    k = pl.program_id(0)

    @pl.when(k == 0)
    def _init():
        gram_ref[...] = jnp.zeros_like(gram_ref)

    x = x_ref[...]                                        # (n_pad, TK)
    # G += X_tile @ X_tile^T on the MXU, accumulating in f32.
    # (Contraction on dim 1 of both operands; the same VMEM tile is reused as
    #  LHS and RHS, so a pre-transposed HBM copy would only add memory traffic.)
    gram_ref[...] += lax.dot_general(
        x, x, (((1,), (1,)), ((), ())), preferred_element_type=jnp.float32)

    @pl.when(k == pl.num_programs(0) - 1)
    def _epilogue():
        g = gram_ref[...]                                 # (n_pad, n_pad) f32
        row_ids = lax.broadcasted_iota(jnp.int32, (n_pad, n_pad), 0)
        col_ids = lax.broadcasted_iota(jnp.int32, (n_pad, n_pad), 1)

        # Squared norms from the Gram diagonal (no extra sweep of X; lane and
        # sublane reductions over the masked diagonal avoid an explicit
        # transpose).
        diag_g = jnp.where(row_ids == col_ids, g, 0.0)
        sq_col = jnp.sum(diag_g, axis=1, keepdims=True)   # (n_pad, 1)  ||x_i||^2
        sq_row = jnp.sum(diag_g, axis=0, keepdims=True)   # (1, n_pad)  ||x_j||^2

        # torch.cdist(X, X, 2) via ||xi||^2 + ||xj||^2 - 2<xi, xj>.
        d2 = sq_col + sq_row - 2.0 * g
        dist = jnp.sqrt(jnp.maximum(d2, 0.0))

        is_same = ycol_ref[...] == yrow_ref[...]
        contr = jnp.where(is_same, dist, jnp.maximum(0.0, margin - dist))

        # Mask padded rows/cols, then fold sum_j/(n-1) and mean_i into one scale.
        valid = jnp.logical_and(row_ids < n, col_ids < n)
        contr = jnp.where(valid, contr, 0.0)
        out_ref[0, 0] = jnp.sum(contr) * (1.0 / (n * (n - 1)))


def contrastive_distance_loss(X, y, *, margin=1.0, max_tk=1024):
    """Forward pass of ContrastiveDistanceLoss for a single X (X1 == X2)."""
    n = X.shape[0]
    if n < 2:
        raise ValueError("ContrastiveDistanceLoss requires batch size >= 2")

    xf = X.reshape(n, -1)                 # flatten(start_dim=1), native dtype
    if not jnp.issubdtype(xf.dtype, jnp.floating):
        xf = xf.astype(jnp.float32)
    d = xf.shape[1]
    itemsize = xf.dtype.itemsize

    # Alignment: sublane-pad N to 8, lane-pad D to 128.
    n_pad = _round_up(n, 8)
    d_pad = _round_up(d, 128)

    # Tile the feature axis: largest multiple of 128 that (a) divides d_pad,
    # (b) keeps the double-buffered (n_pad, TK) input under ~8 MiB, (c) is at
    # most max_tk.  Safe against v7x's smaller (64 MiB physical) VMEM.
    input_budget = 8 * 1024 * 1024
    cap = max(128, (input_budget // (2 * n_pad * itemsize)) // 128 * 128)
    tk = max(128, min(d_pad, max_tk, cap) // 128 * 128)
    while d_pad % tk:
        tk -= 128

    if (n_pad, d_pad) != (n, d):
        xf = jnp.pad(xf, ((0, n_pad - n), (0, d_pad - d)))
    y = y.astype(jnp.int32)
    if n_pad != n:
        y = jnp.pad(y, (0, n_pad - n), constant_values=-1)
    ycol = y.reshape(n_pad, 1)
    yrow = y.reshape(1, n_pad)

    kernel = functools.partial(_contrastive_kernel, margin=float(margin),
                               n=n, n_pad=n_pad)

    grid = (d_pad // tk,)
    grid_spec = pltpu.PrefetchScalarGridSpec(
        num_scalar_prefetch=0,
        grid=grid,
        in_specs=[
            pl.BlockSpec((n_pad, tk), lambda k: (0, k)),   # streamed features
            pl.BlockSpec((n_pad, 1), lambda k: (0, 0)),    # labels (column)
            pl.BlockSpec((1, n_pad), lambda k: (0, 0)),    # labels (row)
        ],
        out_specs=pl.BlockSpec((1, 1), lambda k: (0, 0),
                               memory_space=pltpu.MemorySpace.SMEM),
        scratch_shapes=[pltpu.VMEM((n_pad, n_pad), jnp.float32)],
    )

    # VMEM requirement: double-buffered input slab + Gram accumulator +
    # epilogue temporaries (several (n_pad, n_pad) f32 live values) + headroom.
    vmem_need = (2 * n_pad * tk * itemsize
                 + n_pad * n_pad * 4
                 + 8 * n_pad * n_pad * 4
                 + (1 << 20))
    compiler_params = pltpu.CompilerParams(
        dimension_semantics=("arbitrary",),   # D axis is a reduction
        vmem_limit_bytes=min(48 * 1024 * 1024,
                             max(16 * 1024 * 1024, int(1.25 * vmem_need))),
    )

    cost = pl.CostEstimate(
        flops=2 * n * n * d + 8 * n * n,
        transcendentals=n * n,                      # sqrt per pair
        bytes_accessed=n_pad * d_pad * itemsize + 2 * n_pad * 4 + 4,
    )

    out = pl.pallas_call(
        kernel,
        out_shape=jax.ShapeDtypeStruct((1, 1), jnp.float32),
        grid_spec=grid_spec,
        compiler_params=compiler_params,
        cost_estimate=cost,
    )(xf, ycol, yrow)
    return out[0, 0]


def _reference(X, y, margin=1.0):
    """Plain-JAX mirror of the PyTorch forward with default config."""
    n = X.shape[0]
    xf = X.reshape(n, -1).astype(jnp.float32)
    d2 = jnp.sum((xf[:, None, :] - xf[None, :, :]) ** 2, axis=-1)
    dist = jnp.sqrt(jnp.maximum(d2, 0.0))
    is_same = (y[None, :] == y[:, None]).astype(jnp.float32)
    contr = is_same * dist + (1.0 - is_same) * jnp.maximum(0.0, margin - dist)
    return jnp.mean(jnp.sum(contr, axis=-1) / (n - 1))


if __name__ == "__main__":
    key = jax.random.PRNGKey(0)
    k1, k2, k3, k4 = jax.random.split(key, 4)

    # Case 1: aligned shapes; D = 1024 exercises the Gram accumulator path.
    N, C, H, W = 8, 4, 16, 16
    X1 = jax.random.normal(k1, (N, C, H, W), dtype=jnp.float32)
    y1 = jax.random.randint(k2, (N,), 0, 3, dtype=jnp.int32)
    loss1 = jax.block_until_ready(contrastive_distance_loss(X1, y1, margin=1.0))
    ref1 = _reference(X1, y1, 1.0)
    assert jnp.allclose(loss1, ref1, rtol=1e-3, atol=1e-3), (loss1, ref1)

    # Case 2: ragged shapes (N=6, D=300) exercising the N/D padding + masking,
    # with a small tile cap to force a multi-step pipelined D-reduction.
    N2, C2, H2, W2 = 6, 3, 10, 10
    X2 = jax.random.normal(k3, (N2, C2, H2, W2), dtype=jnp.float32)
    y2 = jax.random.randint(k4, (N2,), 0, 2, dtype=jnp.int32)
    loss2 = jax.block_until_ready(
        contrastive_distance_loss(X2, y2, margin=1.0, max_tk=128))
    ref2 = _reference(X2, y2, 1.0)
    assert jnp.allclose(loss2, ref2, rtol=1e-3, atol=1e-3), (loss2, ref2)

    print("KERNEL_OK")
</pallas_src>

<mosaic_0001>
module attributes {stable_mosaic.version = 11 : i64} {
  func.func @_contrastive_kernel(%arg0: i32, %arg1: memref<8x1024xf32, #tpu.memory_space<vmem>>, %arg2: memref<8x1xi32, #tpu.memory_space<vmem>>, %arg3: memref<1x8xi32, #tpu.memory_space<vmem>>, %arg4: memref<1x1xf32, #tpu.memory_space<smem>>, %arg5: memref<8x8xf32, #tpu.memory_space<vmem>>) attributes {dimension_semantics = [#tpu.dimension_semantics<arbitrary>], iteration_bounds = array<i64: 1>, scalar_prefetch = 0 : i64, scratch_operands = 1 : i64, tpu.core_type = #tpu.core_type<tc>, window_params = [{transform_indices = @transform_0, window_bounds = array<i64: 8, 1024>}, {pipeline_mode = #tpu.pipeline_mode<synchronous>, transform_indices = @transform_1, window_bounds = array<i64: 8, 1>}, {pipeline_mode = #tpu.pipeline_mode<synchronous>, transform_indices = @transform_2, window_bounds = array<i64: 1, 8>}, {transform_indices = @transform_3, window_bounds = array<i64: 1, 1>}]} {
    %c0_i32 = arith.constant 0 : i32
    %0 = arith.cmpi eq, %arg0, %c0_i32 : i32
    %1 = arith.extui %0 : i1 to i32
    %c0_i32_0 = arith.constant 0 : i32
    %2 = arith.cmpi ne, %1, %c0_i32_0 : i32
    scf.if %2 {
      %cst_8 = arith.constant 0.000000e+00 : f32
      %11 = vector.broadcast %cst_8 : f32 to vector<8x8xf32>
      %c0_9 = arith.constant 0 : index
      %c0_10 = arith.constant 0 : index
      %12 = vector.load %arg5[%c0_9, %c0_10] : memref<8x8xf32, #tpu.memory_space<vmem>>, vector<8x8xf32>
      tpu.vector_store %arg5[%c0_9, %c0_10], %11 {strides = array<i32>} : memref<8x8xf32, #tpu.memory_space<vmem>>, vector<8x8xf32>,
    } else {
    }
    %c0 = arith.constant 0 : index
    %c0_1 = arith.constant 0 : index
    %3 = vector.load %arg1[%c0, %c0_1] : memref<8x1024xf32, #tpu.memory_space<vmem>>, vector<8x1024xf32>
    %c0_2 = arith.constant 0 : index
    %c0_3 = arith.constant 0 : index
    %4 = vector.load %arg5[%c0_2, %c0_3] : memref<8x8xf32, #tpu.memory_space<vmem>>, vector<8x8xf32>
    %cst = arith.constant dense<0.000000e+00> : vector<8x8xf32>
    %5 = tpu.matmul %3, %3, %cst {dimension_numbers = #tpu.dot_dimension_numbers<[1], [1], [0], [0], [0, 0, 1, 0], [], []>} : vector<8x1024xf32>, vector<8x1024xf32>, vector<8x8xf32> -> vector<8x8xf32>
    %6 = arith.addf %4, %5 : vector<8x8xf32>
    %c0_4 = arith.constant 0 : index
    %c0_5 = arith.constant 0 : index
    %7 = vector.load %arg5[%c0_4, %c0_5] : memref<8x8xf32, #tpu.memory_space<vmem>>, vector<8x8xf32>
    tpu.vector_store %arg5[%c0_4, %c0_5], %6 {strides = array<i32>} : memref<8x8xf32, #tpu.memory_space<vmem>>, vector<8x8xf32>,
    %c0_i32_6 = arith.constant 0 : i32
    %8 = arith.cmpi eq, %arg0, %c0_i32_6 : i32
    %9 = arith.extui %8 : i1 to i32
    %c0_i32_7 = arith.constant 0 : i32
    %10 = arith.cmpi ne, %9, %c0_i32_7 : i32
    scf.if %10 {
      %c0_8 = arith.constant 0 : index
      %c0_9 = arith.constant 0 : index
      %11 = vector.load %arg5[%c0_8, %c0_9] : memref<8x8xf32, #tpu.memory_space<vmem>>, vector<8x8xf32>
      %12 = tpu.iota {dimensions = array<i32: 0>} : vector<8x8xi32>
      %13 = tpu.iota {dimensions = array<i32: 1>} : vector<8x8xi32>
      %14 = arith.cmpi eq, %12, %13 : vector<8x8xi32>
      %cst_10 = arith.constant 0.000000e+00 : f32
      %15 = vector.broadcast %cst_10 : f32 to vector<8x8xf32>
      %16 = arith.select %14, %11, %15 : vector<8x8xi1>, vector<8x8xf32>
      %cst_11 = arith.constant dense<0.000000e+00> : vector<8xf32>
      %17 = vector.multi_reduction <add>, %16, %cst_11 [1] : vector<8x8xf32> to vector<8xf32>
      %18 = vector.shape_cast %17 : vector<8xf32> to vector<8x1xf32>
      %cst_12 = arith.constant dense<0.000000e+00> : vector<8xf32>
      %19 = vector.multi_reduction <add>, %16, %cst_12 [0] : vector<8x8xf32> to vector<8xf32>
      %20 = vector.shape_cast %19 : vector<8xf32> to vector<1x8xf32>
      %21 = vector.broadcast %18 : vector<8x1xf32> to vector<8x8xf32>
      %22 = vector.broadcast %20 : vector<1x8xf32> to vector<8x8xf32>
      %23 = arith.addf %21, %22 : vector<8x8xf32>
      %cst_13 = arith.constant 2.000000e+00 : f32
      %24 = vector.broadcast %cst_13 : f32 to vector<8x8xf32>
      %25 = arith.mulf %24, %11 : vector<8x8xf32>
      %26 = arith.subf %23, %25 : vector<8x8xf32>
      %cst_14 = arith.constant 0.000000e+00 : f32
      %27 = vector.broadcast %cst_14 : f32 to vector<8x8xf32>
      %28 = arith.maximumf %26, %27 : vector<8x8xf32>
      %29 = math.sqrt %28 : vector<8x8xf32>
      %c0_15 = arith.constant 0 : index
      %c0_16 = arith.constant 0 : index
      %30 = vector.load %arg2[%c0_15, %c0_16] : memref<8x1xi32, #tpu.memory_space<vmem>>, vector<8x1xi32>
      %c0_17 = arith.constant 0 : index
      %c0_18 = arith.constant 0 : index
      %31 = vector.load %arg3[%c0_17, %c0_18] : memref<1x8xi32, #tpu.memory_space<vmem>>, vector<1x8xi32>
      %32 = vector.broadcast %30 : vector<8x1xi32> to vector<8x8xi32>
      %33 = vector.broadcast %31 : vector<1x8xi32> to vector<8x8xi32>
      %34 = arith.cmpi eq, %32, %33 : vector<8x8xi32>
      %cst_19 = arith.constant 1.000000e+00 : f32
      %35 = vector.broadcast %cst_19 : f32 to vector<8x8xf32>
      %36 = arith.subf %35, %29 : vector<8x8xf32>
      %cst_20 = arith.constant 0.000000e+00 : f32
      %37 = vector.broadcast %cst_20 : f32 to vector<8x8xf32>
      %38 = arith.maximumf %37, %36 : vector<8x8xf32>
      %39 = arith.select %34, %29, %38 : vector<8x8xi1>, vector<8x8xf32>
      %c8_i32 = arith.constant 8 : i32
      %40 = vector.broadcast %c8_i32 : i32 to vector<8x8xi32>
      %41 = arith.cmpi slt, %12, %40 : vector<8x8xi32>
      %c8_i32_21 = arith.constant 8 : i32
      %42 = vector.broadcast %c8_i32_21 : i32 to vector<8x8xi32>
      %43 = arith.cmpi slt, %13, %42 : vector<8x8xi32>
      %44 = arith.andi %41, %43 : vector<8x8xi1>
      %cst_22 = arith.constant 0.000000e+00 : f32
      %45 = vector.broadcast %cst_22 : f32 to vector<8x8xf32>
      %46 = arith.select %44, %39, %45 : vector<8x8xi1>, vector<8x8xf32>
      %47 = vector.shape_cast %46 : vector<8x8xf32> to vector<1x8x8xf32>
      %cst_23 = arith.constant dense<0.000000e+00> : vector<1xf32>
      %48 = vector.multi_reduction <add>, %47, %cst_23 [1, 2] : vector<1x8x8xf32> to vector<1xf32>
      %49 = vector.shape_cast %48 : vector<1xf32> to vector<1x1x1xf32>
      %50 = vector.extract %49[0, 0, 0] : f32 from vector<1x1x1xf32>
      %cst_24 = arith.constant 0.0178571437 : f32
      %51 = arith.mulf %50, %cst_24 : f32
      %c0_25 = arith.constant 0 : index
      %c0_26 = arith.constant 0 : index
      %52 = memref.load %arg4[%c0_25, %c0_26] : memref<1x1xf32, #tpu.memory_space<smem>>
      memref.store %51, %arg4[%c0_25, %c0_26] : memref<1x1xf32, #tpu.memory_space<smem>>
    } else {
    }
    return
  }
  func.func @transform_0(%arg0: i32) -> (i32, i32) {
    %c0_i32 = arith.constant 0 : i32
    %c0_i32_0 = arith.constant 0 : i32
    return %c0_i32, %arg0 : i32, i32
  }
  func.func @transform_1(%arg0: i32) -> (i32, i32) {
    %c0_i32 = arith.constant 0 : i32
    %c0_i32_0 = arith.constant 0 : i32
    %c0_i32_1 = arith.constant 0 : i32
    return %c0_i32, %c0_i32_0 : i32, i32
  }
  func.func @transform_2(%arg0: i32) -> (i32, i32) {
    %c0_i32 = arith.constant 0 : i32
    %c0_i32_0 = arith.constant 0 : i32
    %c0_i32_1 = arith.constant 0 : i32
    return %c0_i32, %c0_i32_0 : i32, i32
  }
  func.func @transform_3(%arg0: i32) -> (i32, i32) {
    %c0_i32 = arith.constant 0 : i32
    %c0_i32_0 = arith.constant 0 : i32
    %c0_i32_1 = arith.constant 0 : i32
    return %c0_i32, %c0_i32_0 : i32, i32
  }
}

</mosaic_0001>

<llo_original>
// kernel: tpu_custom_call.1
$region0: #{tpu_custom_call.1}
  #allocation0 [shape = 'u32[]', space=smem, size = 0x4, offset = 0x4, fixed_abs, tag = 'smem constant byte address 0x4 - core index']
  #allocation1 [shape = 'u32[144,128]{1,0:T(1,128)}', space=vmem, size = 0x12000, scoped, tag = 'internal scratch']
  #allocation2 [shape = 'f32[8,8]{1,0:T(8,128)}', space=vmem, size = 0x1000, scoped, tag = 'scratch operand']
  %s0 = inlined_call_operand.hbm [shape: f32[8,1024], index: 0, kind: input, shape index: {}]
  %s1 = inlined_call_operand.vmem [shape: s32[8,1], index: 1, kind: input, shape index: {}]
  %s2 = inlined_call_operand.vmem [shape: s32[1,8], index: 2, kind: input, shape index: {}]
  %s3 = inlined_call_operand.hbm [shape: f32[1,1], index: 3, kind: output, shape index: {}]
  %s4 = sld [smem:[#allocation0]]
  $region34: #{tpu_custom_call.1} parent=0
    _
  %s6 = ssub.s32 1, %s4
  %s7 = scalar_select 0, %s6, %s4
  $region1: #{tpu_custom_call.1} parent=0
    #allocation3 [shape = 'u8[32768]{0}', space=vmem, size = 0x8000, scoped, tag = 'input window, operand 0, single buffered']
    #allocation4 [shape = 's32[1]{0}', space=sflag, size = 0x4, scoped, tag = 'scoped memory for tpu_custom_call.1']
    #allocation5 [shape = 's32[1]{0}', space=sflag, size = 0x4, scoped, tag = 'scoped memory for tpu_custom_call.1']
    #allocation6 [shape = 'u8[512]{0}', space=smem, size = 0x200, scoped, tag = 'output window, operand 0, single buffered']
    %8 = vsyncpa [#allocation4], 0
    %9 = vsyncpa [#allocation5], 0
    // Predicated region
    $region2: #{tpu_custom_call.1} parent=1 // pred_check
      _
    $region3: #{tpu_custom_call.1} parent=1 // pred_check_branch
      %11 = sbr.rel (0) target = $region5
    $region4: #{tpu_custom_call.1} parent=1 // pred_region
      %s13 = ssub.s32 1024, 1024
      %14 = vsyncadd [#allocation4], %s13
      %s16 = sshll.u32 [#allocation3], 4
      %s17 = int_to_ptr.vmem [resolvable:$true] %s16
      %19 = dma.hbm_to_vmem [thread:$0]  %s0, 1024, %s17, [#allocation4]
    $region5: #{tpu_custom_call.1} parent=1 // pred_fallthru
      _
    // Predicated region
    $region6: #{tpu_custom_call.1} parent=1 // pred_check
      _
    $region7: #{tpu_custom_call.1} parent=1 // pred_check_branch
      %21 = sbr.rel (0) target = $region9
    $region8: #{tpu_custom_call.1} parent=1 // pred_region
      _
    $region9: #{tpu_custom_call.1} parent=1 // pred_fallthru
      _
    // Predicated region
    $region10: #{tpu_custom_call.1} parent=1 // pred_check
      _
    $region11: #{tpu_custom_call.1} parent=1 // pred_check_branch
      %23 = sbr.rel (0) target = $region13
    $region12: #{tpu_custom_call.1} parent=1 // pred_region
      _
    $region13: #{tpu_custom_call.1} parent=1 // pred_fallthru
      _
    // Predicated region
    $region14: #{tpu_custom_call.1} parent=1 // pred_check
      _
    $region15: #{tpu_custom_call.1} parent=1 // pred_check_branch
      %25 = sbr.rel (0) target = $region17
    $region16: #{tpu_custom_call.1} parent=1 // pred_region
      %26 = dma.done [#allocation4], 1024
    $region17: #{tpu_custom_call.1} parent=1 // pred_fallthru
      _
    %p27 = scmp.eq.s32.totalorder 0, 0
    // Predicated region
    $region18: #{tpu_custom_call.1} parent=1 // pred_check
      %p28 = pneg %p27
    $region19: #{tpu_custom_call.1} parent=1 // pred_check_branch
      %30 = sbr.rel (%p28) target = $region21
    $region20: #{tpu_custom_call.1} parent=1 // pred_region
      %vm31 = vcmask 64512
      %32 = vst.msk [vmem:[#allocation2] sm:$0xff] %vm31, 0.0
    $region21: #{tpu_custom_call.1} parent=1 // pred_fallthru
      _
    %v33 = vld [vmem:[#allocation3] sm:$0xff]
    %v34 = vld [vmem:[#allocation3 + $0x8] sm:$0xff]
    %v35 = vld [vmem:[#allocation3 + $0x10] sm:$0xff]
    %v36 = vld [vmem:[#allocation3 + $0x18] sm:$0xff]
    %v37 = vld [vmem:[#allocation3 + $0x20] sm:$0xff]
    %v38 = vld [vmem:[#allocation3 + $0x28] sm:$0xff]
    %v39 = vld [vmem:[#allocation3 + $0x30] sm:$0xff]
    %v40 = vld [vmem:[#allocation3 + $0x38] sm:$0xff]
    %v41 = vld [vmem:[#allocation2] sm:$0xff]
    %42 = vmatprep.subr.mxu0 %v34
    %43 = vmatpush1.xpose.msra.mxu0 %v33
    %44 = vmatprep.subr.mxu0 0.0
    %45 = vmatpush1.xpose.msra.mxu0 0.0
    %46 = vmatprep.subr.mxu0 0.0
    %47 = vmatpush1.xpose.msra.mxu0 0.0
    %48 = vmatprep.subr.mxu0 0.0
    %49 = vmatpush1.xpose.msra.mxu0 0.0
    %50 = vmatprep.subr.mxu0 0.0
    %51 = vmatpush1.xpose.msra.mxu0 0.0
    %52 = vmatprep.subr.mxu0 0.0
    %53 = vmatpush1.xpose.msra.mxu0 0.0
    %54 = vmatprep.subr.mxu0 0.0
    %55 = vmatpush1.xpose.msra.mxu0 0.0
    %56 = vmatprep.subr.mxu0 0.0
    %57 = vmatpush1.xpose.msra.mxu0 0.0
    %58 = vmatprep.subr.mxu0 0.0
    %59 = vmatpush1.xpose.msra.mxu0 0.0
    %60 = vmatprep.subr.mxu0 0.0
    %61 = vmatpush1.xpose.msra.mxu0 0.0
    %62 = vmatprep.subr.mxu0 0.0
    %63 = vmatpush1.xpose.msra.mxu0 0.0
    %64 = vmatprep.subr.mxu0 0.0
    %65 = vmatpush1.xpose.msra.mxu0 0.0
    %66 = vmatprep.subr.mxu0 0.0
    %67 = vmatpush1.xpose.msra.mxu0 0.0
    %68 = vmatprep.subr.mxu0 0.0
    %69 = vmatpush1.xpose.msra.mxu0 0.0
    %70 = vmatprep.subr.mxu0 0.0
    %71 = vmatpush1.xpose.msra.mxu0 0.0
    %72 = vmatprep.subr.mxu0 0.0
    %73 = vmatpush1.xpose.msra.mxu0 0.0
    %74 = vmatprep.subr.mxu0 0.0
    %75 = vmatpush1.xpose.msra.mxu0 0.0
    %76 = vmatprep.subr.mxu0 0.0
    %77 = vmatpush1.xpose.msra.mxu0 0.0
    %78 = vmatprep.subr.mxu0 0.0
    %79 = vmatpush1.xpose.msra.mxu0 0.0
    %80 = vmatprep.subr.mxu0 0.0
    %81 = vmatpush1.xpose.msra.mxu0 0.0
    %82 = vmatprep.subr.mxu0 0.0
    %83 = vmatpush1.xpose.msra.mxu0 0.0
    %84 = vmatprep.subr.mxu0 0.0
    %85 = vmatpush1.xpose.msra.mxu0 0.0
    %86 = vmatprep.subr.mxu0 0.0
    %87 = vmatpush1.xpose.msra.mxu0 0.0
    %88 = vmatprep.subr.mxu0 0.0
    %89 = vmatpush1.xpose.msra.mxu0 0.0
    %90 = vmatprep.subr.mxu0 0.0
    %91 = vmatpush1.xpose.msra.mxu0 0.0
    %92 = vmatprep.subr.mxu0 0.0
    %93 = vmatpush1.xpose.msra.mxu0 0.0
    %94 = vmatprep.subr.mxu0 0.0
    %95 = vmatpush1.xpose.msra.mxu0 0.0
    %96 = vmatprep.subr.mxu0 0.0
    %97 = vmatpush1.xpose.msra.mxu0 0.0
    %98 = vmatprep.subr.mxu0 0.0
    %99 = vmatpush1.xpose.msra.mxu0 0.0
    %100 = vmatprep.subr.mxu0 0.0
    %101 = vmatpush1.xpose.msra.mxu0 0.0
    %102 = vmatprep.subr.mxu0 0.0
    %103 = vmatpush1.xpose.msra.mxu0 0.0
    %104 = vmatprep.subr.mxu0 0.0
    %105 = vmatpush1.xpose.msra.mxu0 0.0
    %106 = vmatprep.mubr.f32.mxu0 %v34
    %107 = vmatmul.mubr.f32.gmra.mrb[0].mxu0 %v33
    %v108 = vpop.f32.mrb[0].mxu0
    %v109 = vadd.f32 0.0, %v108
    %v110 = vpop.f32.mrb[0].mxu0
    %111 = vdwg.mxu0
    %112 = vmatprep.subr.mxu0 %v36
    %113 = vmatpush1.xpose.msra.mxu0 %v35
    %114 = vmatprep.subr.mxu0 0.0
    %115 = vmatpush1.xpose.msra.mxu0 0.0
    %116 = vmatprep.subr.mxu0 0.0
    %117 = vmatpush1.xpose.msra.mxu0 0.0
    %118 = vmatprep.subr.mxu0 0.0
    %119 = vmatpush1.xpose.msra.mxu0 0.0
    %120 = vmatprep.subr.mxu0 0.0
    %121 = vmatpush1.xpose.msra.mxu0 0.0
    %122 = vmatprep.subr.mxu0 0.0
    %123 = vmatpush1.xpose.msra.mxu0 0.0
    %124 = vmatprep.subr.mxu0 0.0
    %125 = vmatpush1.xpose.msra.mxu0 0.0
    %126 = vmatprep.subr.mxu0 0.0
    %127 = vmatpush1.xpose.msra.mxu0 0.0
    %128 = vmatprep.subr.mxu0 0.0
    %129 = vmatpush1.xpose.msra.mxu0 0.0
    %130 = vmatprep.subr.mxu0 0.0
    %131 = vmatpush1.xpose.msra.mxu0 0.0
    %132 = vmatprep.subr.mxu0 0.0
    %133 = vmatpush1.xpose.msra.mxu0 0.0
    %134 = vmatprep.subr.mxu0 0.0
    %135 = vmatpush1.xpose.msra.mxu0 0.0
    %136 = vmatprep.subr.mxu0 0.0
    %137 = vmatpush1.xpose.msra.mxu0 0.0
    %138 = vmatprep.subr.mxu0 0.0
    %139 = vmatpush1.xpose.msra.mxu0 0.0
    %140 = vmatprep.subr.mxu0 0.0
    %141 = vmatpush1.xpose.msra.mxu0 0.0
    %142 = vmatprep.subr.mxu0 0.0
    %143 = vmatpush1.xpose.msra.mxu0 0.0
    %144 = vmatprep.subr.mxu0 0.0
    %145 = vmatpush1.xpose.msra.mxu0 0.0
    %146 = vmatprep.subr.mxu0 0.0
    %147 = vmatpush1.xpose.msra.mxu0 0.0
    %148 = vmatprep.subr.mxu0 0.0
    %149 = vmatpush1.xpose.msra.mxu0 0.0
    %150 = vmatprep.subr.mxu0 0.0
    %151 = vmatpush1.xpose.msra.mxu0 0.0
    %152 = vmatprep.subr.mxu0 0.0
    %153 = vmatpush1.xpose.msra.mxu0 0.0
    %154 = vmatprep.subr.mxu0 0.0
    %155 = vmatpush1.xpose.msra.mxu0 0.0
    %156 = vmatprep.subr.mxu0 0.0
    %157 = vmatpush1.xpose.msra.mxu0 0.0
    %158 = vmatprep.subr.mxu0 0.0
    %159 = vmatpush1.xpose.msra.mxu0 0.0
    %160 = vmatprep.subr.mxu0 0.0
    %161 = vmatpush1.xpose.msra.mxu0 0.0
    %162 = vmatprep.subr.mxu0 0.0
    %163 = vmatpush1.xpose.msra.mxu0 0.0
    %164 = vmatprep.subr.mxu0 0.0
    %165 = vmatpush1.xpose.msra.mxu0 0.0
    %166 = vmatprep.subr.mxu0 0.0
    %167 = vmatpush1.xpose.msra.mxu0 0.0
    %168 = vmatprep.subr.mxu0 0.0
    %169 = vmatpush1.xpose.msra.mxu0 0.0
    %170 = vmatprep.subr.mxu0 0.0
    %171 = vmatpush1.xpose.msra.mxu0 0.0
    %172 = vmatprep.subr.mxu0 0.0
    %173 = vmatpush1.xpose.msra.mxu0 0.0
    %174 = vmatprep.subr.mxu0 0.0
    %175 = vmatpush1.xpose.msra.mxu0 0.0
    %176 = vmatprep.mubr.f32.mxu0 %v36
    %177 = vmatmul.mubr.f32.gmra.mrb[0].mxu0 %v35
    %v178 = vpop.f32.mrb[0].mxu0
    %v179 = vadd.f32 %v109, %v178
    %v180 = vpop.f32.mrb[0].mxu0
    %181 = vdwg.mxu0
    %182 = vmatprep.subr.mxu0 %v38
    %183 = vmatpush1.xpose.msra.mxu0 %v37
    %184 = vmatprep.subr.mxu0 0.0
    %185 = vmatpush1.xpose.msra.mxu0 0.0
    %186 = vmatprep.subr.mxu0 0.0
    %187 = vmatpush1.xpose.msra.mxu0 0.0
    %188 = vmatprep.subr.mxu0 0.0
    %189 = vmatpush1.xpose.msra.mxu0 0.0
    %190 = vmatprep.subr.mxu0 0.0
    %191 = vmatpush1.xpose.msra.mxu0 0.0
    %192 = vmatprep.subr.mxu0 0.0
    %193 = vmatpush1.xpose.msra.mxu0 0.0
    %194 = vmatprep.subr.mxu0 0.0
    %195 = vmatpush1.xpose.msra.mxu0 0.0
    %196 = vmatprep.subr.mxu0 0.0
    %197 = vmatpush1.xpose.msra.mxu0 0.0
    %198 = vmatprep.subr.mxu0 0.0
    %199 = vmatpush1.xpose.msra.mxu0 0.0
    %200 = vmatprep.subr.mxu0 0.0
    %201 = vmatpush1.xpose.msra.mxu0 0.0
    %202 = vmatprep.subr.mxu0 0.0
    %203 = vmatpush1.xpose.msra.mxu0 0.0
    %204 = vmatprep.subr.mxu0 0.0
    %205 = vmatpush1.xpose.msra.mxu0 0.0
    %206 = vmatprep.subr.mxu0 0.0
    %207 = vmatpush1.xpose.msra.mxu0 0.0
    %208 = vmatprep.subr.mxu0 0.0
    %209 = vmatpush1.xpose.msra.mxu0 0.0
    %210 = vmatprep.subr.mxu0 0.0
    %211 = vmatpush1.xpose.msra.mxu0 0.0
    %212 = vmatprep.subr.mxu0 0.0
    %213 = vmatpush1.xpose.msra.mxu0 0.0
    %214 = vmatprep.subr.mxu0 0.0
    %215 = vmatpush1.xpose.msra.mxu0 0.0
    %216 = vmatprep.subr.mxu0 0.0
    %217 = vmatpush1.xpose.msra.mxu0 0.0
    %218 = vmatprep.subr.mxu0 0.0
    %219 = vmatpush1.xpose.msra.mxu0 0.0
    %220 = vmatprep.subr.mxu0 0.0
    %221 = vmatpush1.xpose.msra.mxu0 0.0
    %222 = vmatprep.subr.mxu0 0.0
    %223 = vmatpush1.xpose.msra.mxu0 0.0
    %224 = vmatprep.subr.mxu0 0.0
    %225 = vmatpush1.xpose.msra.mxu0 0.0
    %226 = vmatprep.subr.mxu0 0.0
    %227 = vmatpush1.xpose.msra.mxu0 0.0
    %228 = vmatprep.subr.mxu0 0.0
    %229 = vmatpush1.xpose.msra.mxu0 0.0
    %230 = vmatprep.subr.mxu0 0.0
    %231 = vmatpush1.xpose.msra.mxu0 0.0
    %232 = vmatprep.subr.mxu0 0.0
    %233 = vmatpush1.xpose.msra.mxu0 0.0
    %234 = vmatprep.subr.mxu0 0.0
    %235 = vmatpush1.xpose.msra.mxu0 0.0
    %236 = vmatprep.subr.mxu0 0.0
    %237 = vmatpush1.xpose.msra.mxu0 0.0
    %238 = vmatprep.subr.mxu0 0.0
    %239 = vmatpush1.xpose.msra.mxu0 0.0
    %240 = vmatprep.subr.mxu0 0.0
    %241 = vmatpush1.xpose.msra.mxu0 0.0
    %242 = vmatprep.subr.mxu0 0.0
    %243 = vmatpush1.xpose.msra.mxu0 0.0
    %244 = vmatprep.subr.mxu0 0.0
    %245 = vmatpush1.xpose.msra.mxu0 0.0
    %246 = vmatprep.mubr.f32.mxu0 %v38
    %247 = vmatmul.mubr.f32.gmra.mrb[0].mxu0 %v37
    %v248 = vpop.f32.mrb[0].mxu0
    %v249 = vadd.f32 %v179, %v248
    %v250 = vpop.f32.mrb[0].mxu0
    %251 = vdwg.mxu0
    %252 = vmatprep.subr.mxu0 %v40
    %253 = vmatpush1.xpose.msra.mxu0 %v39
    %254 = vmatprep.subr.mxu0 0.0
    %255 = vmatpush1.xpose.msra.mxu0 0.0
    %256 = vmatprep.subr.mxu0 0.0
    %257 = vmatpush1.xpose.msra.mxu0 0.0
    %258 = vmatprep.subr.mxu0 0.0
    %259 = vmatpush1.xpose.msra.mxu0 0.0
    %260 = vmatprep.subr.mxu0 0.0
    %261 = vmatpush1.xpose.msra.mxu0 0.0
    %262 = vmatprep.subr.mxu0 0.0
    %263 = vmatpush1.xpose.msra.mxu0 0.0
    %264 = vmatprep.subr.mxu0 0.0
    %265 = vmatpush1.xpose.msra.mxu0 0.0
    %266 = vmatprep.subr.mxu0 0.0
    %267 = vmatpush1.xpose.msra.mxu0 0.0
    %268 = vmatprep.subr.mxu0 0.0
    %269 = vmatpush1.xpose.msra.mxu0 0.0
    %270 = vmatprep.subr.mxu0 0.0
    %271 = vmatpush1.xpose.msra.mxu0 0.0
    %272 = vmatprep.subr.mxu0 0.0
    %273 = vmatpush1.xpose.msra.mxu0 0.0
    %274 = vmatprep.subr.mxu0 0.0
    %275 = vmatpush1.xpose.msra.mxu0 0.0
    %276 = vmatprep.subr.mxu0 0.0
    %277 = vmatpush1.xpose.msra.mxu0 0.0
    %278 = vmatprep.subr.mxu0 0.0
    %279 = vmatpush1.xpose.msra.mxu0 0.0
    %280 = vmatprep.subr.mxu0 0.0
    %281 = vmatpush1.xpose.msra.mxu0 0.0
    %282 = vmatprep.subr.mxu0 0.0
    %283 = vmatpush1.xpose.msra.mxu0 0.0
    %284 = vmatprep.subr.mxu0 0.0
    %285 = vmatpush1.xpose.msra.mxu0 0.0
    %286 = vmatprep.subr.mxu0 0.0
    %287 = vmatpush1.xpose.msra.mxu0 0.0
    %288 = vmatprep.subr.mxu0 0.0
    %289 = vmatpush1.xpose.msra.mxu0 0.0
    %290 = vmatprep.subr.mxu0 0.0
    %291 = vmatpush1.xpose.msra.mxu0 0.0
    %292 = vmatprep.subr.mxu0 0.0
    %293 = vmatpush1.xpose.msra.mxu0 0.0
    %294 = vmatprep.subr.mxu0 0.0
    %295 = vmatpush1.xpose.msra.mxu0 0.0
    %296 = vmatprep.subr.mxu0 0.0
    %297 = vmatpush1.xpose.msra.mxu0 0.0
    %298 = vmatprep.subr.mxu0 0.0
    %299 = vmatpush1.xpose.msra.mxu0 0.0
    %300 = vmatprep.subr.mxu0 0.0
    %301 = vmatpush1.xpose.msra.mxu0 0.0
    %302 = vmatprep.subr.mxu0 0.0
    %303 = vmatpush1.xpose.msra.mxu0 0.0
    %304 = vmatprep.subr.mxu0 0.0
    %305 = vmatpush1.xpose.msra.mxu0 0.0
    %306 = vmatprep.subr.mxu0 0.0
    %307 = vmatpush1.xpose.msra.mxu0 0.0
    %308 = vmatprep.subr.mxu0 0.0
    %309 = vmatpush1.xpose.msra.mxu0 0.0
    %310 = vmatprep.subr.mxu0 0.0
    %311 = vmatpush1.xpose.msra.mxu0 0.0
    %312 = vmatprep.subr.mxu0 0.0
    %313 = vmatpush1.xpose.msra.mxu0 0.0
    %314 = vmatprep.subr.mxu0 0.0
    %315 = vmatpush1.xpose.msra.mxu0 0.0
    %316 = vmatprep.mubr.f32.mxu0 %v40
    %317 = vmatmul.mubr.f32.gmra.mrb[0].mxu0 %v39
    %v318 = vpop.f32.mrb[0].mxu0
    %v319 = vadd.f32 %v249, %v318
    %v320 = vpop.f32.mrb[0].mxu0
    %321 = vdwg.mxu0
    %v322 = vadd.f32 %v41, %v319
    %vm323 = vcmask 64512
    %324 = vst.msk [vmem:[#allocation2] sm:$0xff] %vm323, %v322
    // Predicated region
    $region22: #{tpu_custom_call.1} parent=1 // pred_check
      %p325 = pneg %p27
    $region23: #{tpu_custom_call.1} parent=1 // pred_check_branch
      %327 = sbr.rel (%p325) target = $region25
    $region24: #{tpu_custom_call.1} parent=1 // pred_region
      %v328 = vld [vmem:[#allocation2] sm:$0xff]
      %v329 = vlaneseq
      %v330 = vshrl.u32 %v329, 7
      %v331 = vlaneseq
      %v332 = vand.u32 %v331, 127
      %vm333 = vcmp.eq.s32.totalorder %v330, %v332
      %v334 = vsel %vm333, %v328, 0.0
      %v335 = vsel %vm323, %v334, 0.0
      %336 = vadd.xlane.f32.xlu0 %v335
      %v337 = vpop.xlane.xlu0 %336
      %v338 = vrot.slane %v335, 4
      %v339 = vadd.f32 %v335, %v338
      %v340 = vrot.slane %v339, 2
      %v341 = vadd.f32 %v339, %v340
      %v342 = vrot.slane %v341, 1
      %v343 = vadd.f32 %v341, %v342
      %v344 = vadd.f32 %v337, %v343
      %v345 = vmul.f32 %v328, 2.0
      %v346 = vsub.f32 %v344, %v345
      %v347 = vmax.f32 %v346, 0.0
      %v348 = vrsqrt.pop %v347
      %v349 = vmul.f32 %v347, %v348
      %vm350 = vcmp.eq.f32.partialorder %v347, inf
      %v351 = vsel %vm350, %v347, %v349
      %vm352 = vcmp.eq.f32.partialorder %v347, 0.0
      %v353 = vand.u32 %v347, 2147483648
      %v354 = vsel %vm352, %v353, %v351
      %v355 = vld [vmem:[%s1] sm:$0xff]
      %v356 = vld [vmem:[%s2] sm:$0x1]
      %357 = vset.pattern.permute.xlu0 0
      %358 = vperm.xlu0 %357, %v355
      %v359 = vpop.permute.xlu0 %358
      %v360 = vlaneseq
      %v361 = vshrl.u32 %v360, 7
      %v362 = vsub.s32 0, %v361
      %v363 = vrot.slane %v356, %v362
      %vm364 = vcmp.eq.s32.totalorder %v359, %v363
      %v365 = vsub.f32 1.0, %v354
      %v366 = vmax.f32 %v365, 0.0
      %v367 = vsel %vm364, %v354, %v366
      %vm368 = vcmp.lt.s32.totalorder %v330, 8
      %vm369 = vcmp.lt.s32.totalorder %v332, 8
      %vm370 = vmand %vm368, %vm369
      %v371 = vsel %vm370, %v367, 0.0
      %v372 = vsel %vm323, %v371, 0.0
      %373 = vadd.xlane.f32.xlu0 %v372
      %v374 = vpop.xlane.xlu0 %373
      %v375 = vrot.slane %v374, 4
      %v376 = vadd.f32 %v374, %v375
      %v377 = vrot.slane %v376, 2
      %v378 = vadd.f32 %v376, %v377
      %v379 = vrot.slane %v378, 1
      %v380 = vadd.f32 %v378, %v379
      %s381 = vtos %v380
      %s382 = smul.f32 %s381, 0.017857144
      %s383 = scalar_lea.smem [#allocation6], 0
      %384 = sst [smem:[%s383]] %s382
    $region25: #{tpu_custom_call.1} parent=1 // pred_fallthru
      _
    // Predicated region
    $region26: #{tpu_custom_call.1} parent=1 // pred_check
      _
    $region27: #{tpu_custom_call.1} parent=1 // pred_check_branch
      %386 = sbr.rel (0) target = $region29
    $region28: #{tpu_custom_call.1} parent=1 // pred_region
      %s388 = ssub.s32 16, 16
      %389 = vsyncadd [#allocation5], %s388
      %392 = dma.smem_to_hbm [#allocation6], 16, %s3, [#allocation5]
    $region29: #{tpu_custom_call.1} parent=1 // pred_fallthru
      _
    // Predicated region
    $region30: #{tpu_custom_call.1} parent=1 // pred_check
      _
    $region31: #{tpu_custom_call.1} parent=1 // pred_check_branch
      %394 = sbr.rel (0) target = $region33
    $region32: #{tpu_custom_call.1} parent=1 // pred_region
      %395 = dma.done [#allocation5], 16
    $region33: #{tpu_custom_call.1} parent=1 // pred_fallthru
      _
    %396 = sfence
    %397 = vsyncpa [#allocation4], 1
    %398 = vsyncpa [#allocation5], 1

</llo_original>
